<compile_context>
chip_gen: v5e
topology: v5e:2x2
jax: 0.10.0
libtpu: 0.0.40
codegen_flags: <defaults>
</compile_context>

<pallas_src>
import jax
import jax.numpy as jnp
from jax import lax
from jax.experimental import pallas as pl
from jax.experimental.pallas import tpu as pltpu


# ----------------------------------------------------------------------------
# Kernel 1: graph-only preparation (runs ONCE per embedding update, hoisted
# out of the recurrent hot path).
# ----------------------------------------------------------------------------
def _graph_prep_kernel(e_ref, bp_ref, adj_ref, bias_ref):
    """adj = softmax(relu(E E^T), axis=1);  bias = E @ bias_pool."""
    E = e_ref[...].astype(jnp.float32)                             # [N, D]
    logits = lax.dot_general(E, E, (((1,), (1,)), ((), ())),
                             preferred_element_type=jnp.float32)   # [N, N]
    logits = jnp.maximum(logits, 0.0)
    logits = logits - jnp.max(logits, axis=1, keepdims=True)
    expv = jnp.exp(logits)
    denom = jnp.sum(expv, axis=1, keepdims=True)
    # NOTE: approx=True (EUP vrcp) is available, but this kernel runs once,
    # outside the hot path, so the exact reciprocal is kept for the 1e-4 check.
    adj_ref[...] = expv * pl.reciprocal(denom, approx=False)
    bias_ref[...] = jnp.dot(E, bp_ref[...].astype(jnp.float32),
                            preferred_element_type=jnp.float32)    # [N, O]


# ----------------------------------------------------------------------------
# Kernel 2: the AVWGCN graph convolution hot path (fused single MXU matmul).
# ----------------------------------------------------------------------------
def _gconv_kernel(x_ref, adj_ref, erep_ref, wp_ref, bias_ref, out_ref):
    """out[b,n,o] = sum_{d,k,c} x_g[b,n,k,c] * E[n,d] * wp[d,k,c,o] + bias[n,o].

    x_ref    : [TB, N, C]          batch tile of inputs
    adj_ref  : [N, N]     f32      adaptive adjacency (precomputed)
    erep_ref : [N, D*K*C] f32      E repeated K*C times per embedding dim
    wp_ref   : [D*K*C, O] f32      weights_pool flattened (d,k,c)-major
    bias_ref : [N, O]     f32      E @ bias_pool (precomputed)
    out_ref  : [TB, N, O]
    """
    TB, N, C = x_ref.shape
    DKC, O = wp_ref.shape
    D = DKC // (2 * C)                     # cheb_k == 2

    x = x_ref[...].astype(jnp.float32)                             # [TB, N, C]
    adj = adj_ref[...]                                             # [N, N]

    # Chebyshev support k=1: adj @ x, batched over TB with a single 3-D MXU
    # einsum (no per-batch Python unroll).
    adj_b = jnp.broadcast_to(adj[None], (TB, N, N))
    xg1 = jnp.einsum('bnm,bmc->bnc', adj_b, x,
                     preferred_element_type=jnp.float32)           # [TB, N, C]

    # k=0 support is the identity -> x itself; channel layout becomes (k, c).
    xg = jnp.concatenate([x, xg1], axis=2)                         # [TB, N, K*C]

    # Fused operand  L[b,n, d*K*C + k*C + c] = xg[b,n, k*C+c] * E[n,d]:
    # column-tile xg D times (cheap lane concat) and multiply by the
    # pre-repeated embeddings — one VPU multiply, no per-d masked slices.
    xg_t = jnp.concatenate([xg] * D, axis=2)                       # [TB, N, D*K*C]
    L = (xg_t * erep_ref[...][None]).reshape(TB * N, DKC)          # [TB*N, D*K*C]

    # ONE MXU matmul replaces the two weight dots + the per-d accumulation loop.
    out = jnp.dot(L, wp_ref[...], preferred_element_type=jnp.float32)  # [TB*N, O]
    out = out.reshape(TB, N, O) + bias_ref[...][None]
    out_ref[...] = out.astype(out_ref.dtype)


# ----------------------------------------------------------------------------
# Wrappers
# ----------------------------------------------------------------------------
def prepare_graph(node_emb, weights_pool, bias_pool):
    """Parameter-only tensors, computed once (hoisted out of the recurrence)."""
    N, D = node_emb.shape
    D2, K, C, O = weights_pool.shape
    assert D2 == D and K == 2, "cheb_k=2 variant implemented"
    vmem = lambda: pl.BlockSpec(memory_space=pltpu.MemorySpace.VMEM)
    adj, bias = pl.pallas_call(
        _graph_prep_kernel,
        out_shape=(jax.ShapeDtypeStruct((N, N), jnp.float32),
                   jax.ShapeDtypeStruct((N, O), jnp.float32)),
        in_specs=[vmem(), vmem()],
        out_specs=(vmem(), vmem()),
    )(node_emb, bias_pool)
    # (d,k,c)-major fused weight matrix and lane-repeated embeddings (XLA-side,
    # parameter-only, computed once).
    wp = weights_pool.astype(jnp.float32).reshape(D * K * C, O)        # [DKC, O]
    e_rep = jnp.repeat(node_emb.astype(jnp.float32), K * C, axis=1)    # [N, DKC]
    return adj, bias, e_rep, wp


def avwgcn_gconv(x, adj, bias, e_rep, wp, *, batch_tile=None):
    """x: [B,N,C]; returns [B,N,O].  Grid over batch tiles (parallel on v7x)."""
    B, N, C = x.shape
    DKC, O = wp.shape
    if batch_tile is None:
        # Largest divisor of B that keeps the matmul M dimension (TB*N) <= 256.
        batch_tile = 1
        for t in range(min(B, max(1, 256 // N)), 0, -1):
            if B % t == 0:
                batch_tile = t
                break
    TB = batch_tile
    assert B % TB == 0, (B, TB)

    flops = 2 * B * N * N * C + 2 * B * N * DKC * O + B * N * DKC
    bytes_accessed = 4 * (B * N * C + N * N + N * DKC + DKC * O + N * O
                          + B * N * O)

    return pl.pallas_call(
        _gconv_kernel,
        out_shape=jax.ShapeDtypeStruct((B, N, O), x.dtype),
        grid=(B // TB,),
        in_specs=[
            pl.BlockSpec((TB, N, C), lambda i: (i, 0, 0)),   # x: tiled over batch
            pl.BlockSpec((N, N), lambda i: (0, 0)),          # adj: resident
            pl.BlockSpec((N, DKC), lambda i: (0, 0)),        # e_rep: resident
            pl.BlockSpec((DKC, O), lambda i: (0, 0)),        # fused weights
            pl.BlockSpec((N, O), lambda i: (0, 0)),          # bias
        ],
        out_specs=pl.BlockSpec((TB, N, O), lambda i: (i, 0, 0)),
        compiler_params=pltpu.CompilerParams(
            dimension_semantics=("parallel",)),              # v7x: use both TCs
        cost_estimate=pl.CostEstimate(flops=flops, transcendentals=0,
                                      bytes_accessed=bytes_accessed),
    )(x, adj, e_rep, wp, bias)


def avwgcn(x, node_emb, weights_pool, bias_pool, *, batch_tile=None):
    """One-shot convenience: prep (param-only) + fused gconv."""
    adj, bias, e_rep, wp = prepare_graph(node_emb, weights_pool, bias_pool)
    return avwgcn_gconv(x, adj, bias, e_rep, wp, batch_tile=batch_tile)


def avwgcn_ref(x, node_emb, weights_pool, bias_pool):
    """Pure-JAX reference of AVWGCN (mirrors the PyTorch AGCRN code)."""
    adj = jax.nn.softmax(jax.nn.relu(node_emb @ node_emb.T), axis=1)
    N = node_emb.shape[0]
    supports = jnp.stack([jnp.eye(N, dtype=x.dtype), adj])            # [K,N,N]
    x_g = jnp.einsum('knm,bmc->bknc', supports, x)                    # [B,K,N,C]
    x_g = jnp.transpose(x_g, (0, 2, 1, 3))                            # [B,N,K,C]
    W = jnp.einsum('nd,dkco->nkco', node_emb, weights_pool)           # [N,K,C,O]
    b = node_emb @ bias_pool                                          # [N,O]
    return jnp.einsum('bnkc,nkco->bno', x_g, W) + b


class Diffusion:
    """JAX analogue of the PyTorch `diffusion(nn.Module)` combined model.

    Holds sub-model parameters; the combined forward is intentionally NOT
    implemented (matches the reference).  Use the individual sub-model
    forwards (here: `agcrn_gconv`, the Pallas hot path of agcrn_model).
    """

    def __init__(self, key, num_nodes=16, dim_in=4, dim_out=32,
                 embed_dim=8, cheb_k=2):
        k1, k2, k3 = jax.random.split(key, 3)
        # agcrn_model (AVWGCN) parameters — deterministic synthetic init
        self.node_embeddings = jax.random.normal(
            k1, (num_nodes, embed_dim), jnp.float32)
        self.weights_pool = 0.1 * jax.random.normal(
            k2, (embed_dim, cheb_k, dim_in, dim_out), jnp.float32)
        self.bias_pool = 0.1 * jax.random.normal(
            k3, (embed_dim, dim_out), jnp.float32)
        # Graph-only tensors: computed ONCE here, not per recurrent timestep.
        self._adj, self._bias, self._e_rep, self._wp = prepare_graph(
            self.node_embeddings, self.weights_pool, self.bias_pool)
        # TODO(synk): eps_model (UGnet) parameters omitted — UGnet architecture
        #             is not provided in the given source.

    def forward(self):
        raise NotImplementedError(
            'This CombinedModel does not implement a forward method. '
            'Use individual model forward methods or handle externally.')

    def agcrn_gconv(self, x, batch_tile=None):
        return avwgcn_gconv(x, self._adj, self._bias, self._e_rep, self._wp,
                            batch_tile=batch_tile)


if __name__ == "__main__":
    key = jax.random.PRNGKey(0)
    kx, kp = jax.random.split(key)

    B, N, C, O = 4, 16, 4, 32
    x = jax.random.normal(kx, (B, N, C), jnp.float32)
    model = Diffusion(kp, num_nodes=N, dim_in=C, dim_out=O)

    # Combined forward matches the PyTorch reference: it raises.
    try:
        model.forward()
        raise AssertionError("expected NotImplementedError")
    except NotImplementedError:
        pass

    # batch_tile=2 -> grid of 2 parallel steps (both v7x TensorCores), M=TB*N=32.
    out = model.agcrn_gconv(x, batch_tile=2)
    jax.block_until_ready(out)

    ref = avwgcn_ref(x, model.node_embeddings, model.weights_pool,
                     model.bias_pool)
    assert out.shape == (B, N, O), out.shape
    assert jnp.allclose(out, ref, atol=2e-4, rtol=2e-4), \
        float(jnp.max(jnp.abs(out - ref)))

    print("KERNEL_OK")
</pallas_src>

<mosaic_0001>
module attributes {stable_mosaic.version = 11 : i64} {
  func.func @_graph_prep_kernel(%arg0: memref<16x8xf32, #tpu.memory_space<vmem>>, %arg1: memref<8x32xf32, #tpu.memory_space<vmem>>, %arg2: memref<16x16xf32, #tpu.memory_space<vmem>>, %arg3: memref<16x32xf32, #tpu.memory_space<vmem>>) attributes {dimension_semantics = [], scalar_prefetch = 0 : i64, scratch_operands = 0 : i64, tpu.core_type = #tpu.core_type<tc>} {
    %c0 = arith.constant 0 : index
    %c0_0 = arith.constant 0 : index
    %0 = vector.load %arg0[%c0, %c0_0] : memref<16x8xf32, #tpu.memory_space<vmem>>, vector<16x8xf32>
    %cst = arith.constant dense<0.000000e+00> : vector<16x16xf32>
    %1 = tpu.matmul %0, %0, %cst {dimension_numbers = #tpu.dot_dimension_numbers<[1], [1], [0], [0], [0, 0, 1, 0], [], []>} : vector<16x8xf32>, vector<16x8xf32>, vector<16x16xf32> -> vector<16x16xf32>
    %cst_1 = arith.constant 0.000000e+00 : f32
    %2 = vector.broadcast %cst_1 : f32 to vector<16x16xf32>
    %3 = arith.maximumf %1, %2 : vector<16x16xf32>
    %cst_2 = arith.constant dense<0xFF800000> : vector<16xf32>
    %4 = vector.multi_reduction <maximumf>, %3, %cst_2 [1] : vector<16x16xf32> to vector<16xf32>
    %5 = vector.shape_cast %4 : vector<16xf32> to vector<16x1xf32>
    %6 = vector.broadcast %5 : vector<16x1xf32> to vector<16x16xf32>
    %7 = arith.subf %3, %6 : vector<16x16xf32>
    %8 = math.exp %7 : vector<16x16xf32>
    %cst_3 = arith.constant dense<0.000000e+00> : vector<16xf32>
    %9 = vector.multi_reduction <add>, %8, %cst_3 [1] : vector<16x16xf32> to vector<16xf32>
    %10 = vector.shape_cast %9 : vector<16xf32> to vector<16x1xf32>
    %11 = tpu.reciprocal %10 : vector<16x1xf32> -> vector<16x1xf32>
    %12 = vector.broadcast %11 : vector<16x1xf32> to vector<16x16xf32>
    %13 = arith.mulf %8, %12 : vector<16x16xf32>
    %c0_4 = arith.constant 0 : index
    %c0_5 = arith.constant 0 : index
    %14 = vector.load %arg2[%c0_4, %c0_5] : memref<16x16xf32, #tpu.memory_space<vmem>>, vector<16x16xf32>
    tpu.vector_store %arg2[%c0_4, %c0_5], %13 {strides = array<i32>} : memref<16x16xf32, #tpu.memory_space<vmem>>, vector<16x16xf32>,
    %c0_6 = arith.constant 0 : index
    %c0_7 = arith.constant 0 : index
    %15 = vector.load %arg1[%c0_6, %c0_7] : memref<8x32xf32, #tpu.memory_space<vmem>>, vector<8x32xf32>
    %cst_8 = arith.constant dense<0.000000e+00> : vector<16x32xf32>
    %16 = tpu.matmul %0, %15, %cst_8 {dimension_numbers = #tpu.dot_dimension_numbers<[1], [0], [0], [1], [0, 0, 1, 1], [], []>} : vector<16x8xf32>, vector<8x32xf32>, vector<16x32xf32> -> vector<16x32xf32>
    %c0_9 = arith.constant 0 : index
    %c0_10 = arith.constant 0 : index
    %17 = vector.load %arg3[%c0_9, %c0_10] : memref<16x32xf32, #tpu.memory_space<vmem>>, vector<16x32xf32>
    tpu.vector_store %arg3[%c0_9, %c0_10], %16 {strides = array<i32>} : memref<16x32xf32, #tpu.memory_space<vmem>>, vector<16x32xf32>,
    return
  }
}

</mosaic_0001>

<llo_original>
// kernel: tpu_custom_call.1
$region0: #{tpu_custom_call.1}
  #allocation0 [shape = 'u32[]', space=smem, size = 0x4, offset = 0x4, fixed_abs, tag = 'smem constant byte address 0x4 - core index']
  #allocation1 [shape = 'u32[72,128]{1,0:T(1,128)}', space=vmem, size = 0x9000, scoped, tag = 'internal scratch']
  %s0 = inlined_call_operand.vmem [shape: f32[16,8], index: 0, kind: input, shape index: {}]
  %s1 = inlined_call_operand.vmem [shape: f32[8,32], index: 1, kind: input, shape index: {}]
  %s2 = inlined_call_operand.hbm [shape: f32[16,16], index: 2, kind: output, shape index: {0}]
  %s3 = inlined_call_operand.hbm [shape: f32[16,32], index: 3, kind: output, shape index: {1}]
  %4 = xla_tuple %s2, %s3
  %s5 = sld [smem:[#allocation0]]
  $region26: #{tpu_custom_call.1} parent=0
    _
  %s7 = ssub.s32 1, %s5
  %s8 = scalar_select 0, %s7, %s5
  $region1: #{tpu_custom_call.1} parent=0
    #allocation2 [shape = 'u8[8192]{0}', space=vmem, size = 0x2000, scoped, tag = 'output window, operand 0, single buffered']
    #allocation3 [shape = 's32[1]{0}', space=sflag, size = 0x4, scoped, tag = 'scoped memory for tpu_custom_call.1']
    #allocation4 [shape = 'u8[8192]{0}', space=vmem, size = 0x2000, scoped, tag = 'output window, operand 1, single buffered']
    #allocation5 [shape = 's32[1]{0}', space=sflag, size = 0x4, scoped, tag = 'scoped memory for tpu_custom_call.1']
    %9 = vsyncpa [#allocation3], 0
    %10 = vsyncpa [#allocation5], 0
    // Predicated region
    $region2: #{tpu_custom_call.1} parent=1 // pred_check
      _
    $region3: #{tpu_custom_call.1} parent=1 // pred_check_branch
      %12 = sbr.rel (0) target = $region5
    $region4: #{tpu_custom_call.1} parent=1 // pred_region
      _
    $region5: #{tpu_custom_call.1} parent=1 // pred_fallthru
      _
    // Predicated region
    $region6: #{tpu_custom_call.1} parent=1 // pred_check
      _
    $region7: #{tpu_custom_call.1} parent=1 // pred_check_branch
      %14 = sbr.rel (0) target = $region9
    $region8: #{tpu_custom_call.1} parent=1 // pred_region
      _
    $region9: #{tpu_custom_call.1} parent=1 // pred_fallthru
      _
    %v15 = vld [vmem:[%s0] sm:$0xff]
    %v16 = vld [vmem:[%s0 + $0x8] sm:$0xff]
    %vm17 = vcmask 64512
    %v19 = vsel %vm17, %v15, 0
    %v22 = vsel %vm17, %v16, 0
    %24 = vmatpush.xpose.msra.mxu0 0.0
    %25 = vmatpush.xpose.msra.mxu0 0.0
    %26 = vmatpush.xpose.msra.mxu0 0.0
    %27 = vmatpush.xpose.msra.mxu0 0.0
    %28 = vmatpush.xpose.msra.mxu0 0.0
    %29 = vmatpush.xpose.msra.mxu0 0.0
    %30 = vmatpush.xpose.msra.mxu0 0.0
    %31 = vmatpush.xpose.msra.mxu0 0.0
    %32 = vmatpush.xpose.msra.mxu0 0.0
    %33 = vmatpush.xpose.msra.mxu0 0.0
    %34 = vmatpush.xpose.msra.mxu0 0.0
    %35 = vmatpush.xpose.msra.mxu0 0.0
    %36 = vmatpush.xpose.msra.mxu0 0.0
    %37 = vmatpush.xpose.msra.mxu0 0.0
    %38 = vmatpush.xpose.msra.mxu0 %v22
    %39 = vmatpush.xpose.msra.mxu0 %v19
    %40 = vmatmul.f32.gmra.mxu0 %v19
    %v41 = vpop.f32.mrf.mxu0
    %v42 = vadd.f32 0.0, %v41
    %43 = vmatmul.f32.gmra.mxu0 %v22
    %v44 = vpop.f32.mrf.mxu0
    %v45 = vadd.f32 0.0, %v44
    %46 = vdwg.mxu0
    %v47 = vmax.f32 %v42, 0.0
    %v48 = vmax.f32 %v45, 0.0
    %vm49 = vcmask 130048
    %v50 = vsel %vm49, %v47, -inf
    %51 = vmax.xlane.f32.xlu0 %v50
    %v52 = vpop.xlane.xlu0 %51
    %v53 = vsel %vm49, %v48, -inf
    %54 = vmax.xlane.f32.xlu0 %v53
    %v55 = vpop.xlane.xlu0 %54
    %v56 = vsub.f32 %v47, %v52
    %v57 = vsub.f32 %v48, %v55
    %v58 = vmul.f32 %v56, 1.442695
    %v59 = vpow.pop %v58
    %v60 = vmul.f32 %v57, 1.442695
    %v61 = vpow.pop %v60
    %v62 = vsel %vm49, %v59, 0.0
    %63 = vadd.xlane.f32.xlu0 %v62
    %v64 = vpop.xlane.xlu0 %63
    %v65 = vsel %vm49, %v61, 0.0
    %66 = vadd.xlane.f32.xlu0 %v65
    %v67 = vpop.xlane.xlu0 %66
    %v68 = vrcp.pop %v64
    %v69 = vmul.f32 %v64, %v68
    %v70 = vsub.f32 1.0, %v69
    %v71 = vmul.f32 %v68, %v70
    %v72 = vadd.f32 %v68, %v71
    %vm73 = vweird.f32 %v64
    %vm74 = vweird.f32 %v68
    %vm75 = vmor %vm73, %vm74
    %v76 = vsel %vm75, %v68, %v72
    %v77 = vand.u32 2147483647, %v64
    %vm78 = vcmp.eq.f32.partialorder %v77, 8.507059e+37
    %v79 = vand.u32 %v64, 2147483648
    %v80 = vor.u32 1.1754944e-38, %v79
    %v81 = vsel %vm78, %v80, %v76
    %v82 = vrcp.pop %v67
    %v83 = vmul.f32 %v67, %v82
    %v84 = vsub.f32 1.0, %v83
    %v85 = vmul.f32 %v82, %v84
    %v86 = vadd.f32 %v82, %v85
    %vm87 = vweird.f32 %v67
    %vm88 = vweird.f32 %v82
    %vm89 = vmor %vm87, %vm88
    %v90 = vsel %vm89, %v82, %v86
    %v91 = vand.u32 2147483647, %v67
    %vm92 = vcmp.eq.f32.partialorder %v91, 8.507059e+37
    %v93 = vand.u32 %v67, 2147483648
    %v94 = vor.u32 1.1754944e-38, %v93
    %v95 = vsel %vm92, %v94, %v90
    %v96 = vmul.f32 %v59, %v81
    %v97 = vmul.f32 %v61, %v95
    %98 = vst.msk [vmem:[#allocation2] sm:$0xff] %vm49, %v96
    %99 = vst.msk [vmem:[#allocation2 + $0x8] sm:$0xff] %vm49, %v97
    %v100 = vld [vmem:[%s1] sm:$0xff]
    %101 = vmatpush.msra.mxu0 0.0
    %102 = vmatpush.msra.mxu0 0.0
    %103 = vmatpush.msra.mxu0 0.0
    %104 = vmatpush.msra.mxu0 0.0
    %105 = vmatpush.msra.mxu0 0.0
    %106 = vmatpush.msra.mxu0 0.0
    %107 = vmatpush.msra.mxu0 0.0
    %108 = vmatpush.msra.mxu0 0.0
    %109 = vmatpush.msra.mxu0 0.0
    %110 = vmatpush.msra.mxu0 0.0
    %111 = vmatpush.msra.mxu0 0.0
    %112 = vmatpush.msra.mxu0 0.0
    %113 = vmatpush.msra.mxu0 0.0
    %114 = vmatpush.msra.mxu0 0.0
    %115 = vmatpush.msra.mxu0 0.0
    %116 = vmatpush.msra.mxu0 %v100
    %117 = vmatmul.f32.gmra.mxu0 %v19
    %v118 = vpop.f32.mrf.mxu0
    %v119 = vadd.f32 0.0, %v118
    %120 = vmatmul.f32.gmra.mxu0 %v22
    %v121 = vpop.f32.mrf.mxu0
    %v122 = vadd.f32 0.0, %v121
    %123 = vdwg.mxu0
    %vm124 = vcmask 261120
    %125 = vst.msk [vmem:[#allocation4] sm:$0xff] %vm124, %v119
    %126 = vst.msk [vmem:[#allocation4 + $0x8] sm:$0xff] %vm124, %v122
    // Predicated region
    $region10: #{tpu_custom_call.1} parent=1 // pred_check
      _
    $region11: #{tpu_custom_call.1} parent=1 // pred_check_branch
      %128 = sbr.rel (0) target = $region13
    $region12: #{tpu_custom_call.1} parent=1 // pred_region
      %130 = vsyncadd [#allocation3], 0
      %s131 = sshll.u32 [#allocation2], 4
      %s132 = int_to_ptr.vmem [resolvable:$true] %s131
      %s133 = sshll.u32 %s2, 4
      %s134 = int_to_ptr.hbm [resolvable:$true] %s133
      %139 = dma.vmem_to_hbm [thread:$0]  %s132, 256, %s134, [#allocation3], 128, 128, 8
    $region13: #{tpu_custom_call.1} parent=1 // pred_fallthru
      _
    // Predicated region
    $region14: #{tpu_custom_call.1} parent=1 // pred_check
      _
    $region15: #{tpu_custom_call.1} parent=1 // pred_check_branch
      %141 = sbr.rel (0) target = $region17
    $region16: #{tpu_custom_call.1} parent=1 // pred_region
      %143 = vsyncadd [#allocation5], 0
      %s144 = sshll.u32 [#allocation4], 4
      %s145 = int_to_ptr.vmem [resolvable:$true] %s144
      %s146 = sshll.u32 %s3, 4
      %s147 = int_to_ptr.hbm [resolvable:$true] %s146
      %152 = dma.vmem_to_hbm [thread:$0]  %s145, 256, %s147, [#allocation5], 128, 128, 8
    $region17: #{tpu_custom_call.1} parent=1 // pred_fallthru
      _
    // Predicated region
    $region18: #{tpu_custom_call.1} parent=1 // pred_check
      _
    $region19: #{tpu_custom_call.1} parent=1 // pred_check_branch
      %154 = sbr.rel (0) target = $region21
    $region20: #{tpu_custom_call.1} parent=1 // pred_region
      %156 = dma.done [#allocation3], 256
    $region21: #{tpu_custom_call.1} parent=1 // pred_fallthru
      _
    // Predicated region
    $region22: #{tpu_custom_call.1} parent=1 // pred_check
      _
    $region23: #{tpu_custom_call.1} parent=1 // pred_check_branch
      %158 = sbr.rel (0) target = $region25
    $region24: #{tpu_custom_call.1} parent=1 // pred_region
      %160 = dma.done [#allocation5], 256
    $region25: #{tpu_custom_call.1} parent=1 // pred_fallthru
      _
    %161 = vsyncpa [#allocation3], 1
    %162 = vsyncpa [#allocation5], 1

</llo_original>
